<compile_context>
chip_gen: v6e
topology: v6e:2x2x1
jax: 0.10.0
libtpu: 0.0.40
codegen_flags: <defaults>
</compile_context>

<pallas_src>
import functools

import jax
import jax.numpy as jnp
from jax import lax
from jax.experimental import pallas as pl
from jax.experimental.pallas import tpu as pltpu


def _attention_kernel(x_ref, wqkv_ref, qkv_bias_ref, wproj_ref, bproj_ref, out_ref,
                      *, num_heads, head_dim, use_bias, approx_recip):
    # x_ref:        (N, C)        input dtype (batch dim squeezed by BlockSpec)
    # wqkv_ref:     (3*H*D, C)    PyTorch-layout qkv weight, scale pre-folded into q rows
    # qkv_bias_ref: (1, 3*H*D)    concat(q_bias*scale, 0, v_bias)
    # wproj_ref:    (C, H*D)      PyTorch-layout proj weight (no transpose)
    # bproj_ref:    (1, C)
    # out_ref:      (N, C)
    H, D = num_heads, head_dim
    cdt = x_ref.dtype                                   # MXU operand ("compute") dtype

    x = x_ref[...]                                      # (N, C)
    dn = (((1,), (1,)), ((), ()))                       # contract last axes: y = a @ b.T

    # Fused QKV projection: one wide lane-dense matmul, f32 accumulation on the MXU.
    qkv = lax.dot_general(x, wqkv_ref[...], dn,
                          preferred_element_type=jnp.float32)        # (N, 3*H*D)
    if use_bias:
        qkv = qkv + qkv_bias_ref[...].astype(jnp.float32)            # (1, 3*H*D) broadcast
    qkv = qkv.astype(cdt)                                            # back to operand dtype

    # Per-head attention (H is a small compile-time constant -> static unrolled loop with
    # static lane-dim slices).  Softmax statistics stay in f32.
    ctx_parts = []
    for h in range(H):
        q_h = qkv[:, h * D:(h + 1) * D]                              # (N, D), scale folded
        k_h = qkv[:, (H + h) * D:(H + h + 1) * D]                    # (N, D)
        v_h = qkv[:, (2 * H + h) * D:(2 * H + h + 1) * D]            # (N, D)

        # scores = q_h @ k_h.T without an XLU transpose (contract the D axes directly).
        s = lax.dot_general(q_h, k_h, dn, preferred_element_type=jnp.float32)   # (N, N)
        s = s - jnp.max(s, axis=-1, keepdims=True)
        e = jnp.exp(s)
        denom = jnp.sum(e, axis=-1, keepdims=True)
        if approx_recip:
            p = e * pl.reciprocal(denom, approx=True)                # EUP slot (~free)
        else:
            p = e / denom
        # TODO(synk): attn_drop not implemented (identity at eval / drop=0.0).
        ctx_h = jnp.dot(p.astype(cdt), v_h,
                        preferred_element_type=jnp.float32)          # (N, D)
        ctx_parts.append(ctx_h.astype(cdt))

    ctx_all = jnp.concatenate(ctx_parts, axis=-1)                    # (N, H*D)

    # Deferred output projection: one full-depth (H*D) contraction matmul + bias.
    out = lax.dot_general(ctx_all, wproj_ref[...], dn,
                          preferred_element_type=jnp.float32)        # (N, C)
    out = out + bproj_ref[...].astype(jnp.float32)
    # TODO(synk): proj_drop not implemented (identity at eval / drop=0.0).
    out_ref[...] = out.astype(out_ref.dtype)


def prepare_params(wqkv, q_bias, v_bias, wproj, bproj, *, num_heads, head_dim, scale):
    """One-time (load-time) restructuring / folding of the PyTorch-layout parameters.

    - `scale` is folded into the q rows of wqkv and into q_bias (q*scale == x@(scale*Wq).T
      + scale*q_bias), removing the per-call scale multiply from the hot path.
    - The qkv bias is assembled exactly as the module does:
      concat(q_bias, zeros_like(v_bias), v_bias) -- i.e. the k bias is identically zero
      (BEiT-style attention); this kernel relies on that module-specific layout.
    """
    all_head_dim = num_heads * head_dim
    wqkv = jnp.asarray(wqkv)
    wproj = jnp.asarray(wproj)
    bproj = jnp.asarray(bproj).reshape(1, -1)

    row_scale = jnp.concatenate([
        jnp.full((all_head_dim,), scale, wqkv.dtype),
        jnp.ones((2 * all_head_dim,), wqkv.dtype),
    ])
    wqkv_s = wqkv * row_scale[:, None]                 # fold scale into q rows

    if q_bias is not None:
        qkv_bias = jnp.concatenate(
            [jnp.asarray(q_bias) * scale, jnp.zeros_like(v_bias), jnp.asarray(v_bias)])
        use_bias = True
    else:
        qkv_bias = jnp.zeros((3 * all_head_dim,), wqkv.dtype)
        use_bias = False
    qkv_bias = qkv_bias.reshape(1, 3 * all_head_dim).astype(wqkv.dtype)

    return wqkv_s, qkv_bias, wproj, bproj, use_bias


def attention_forward(x, wqkv_s, qkv_bias, wproj, bproj,
                      *, num_heads, head_dim, use_bias, approx_recip=True):
    """x: (B, N, C); params pre-restructured by prepare_params()."""
    B, N, C = x.shape
    H, D = num_heads, head_dim
    all_head_dim = H * D
    assert wqkv_s.shape == (3 * all_head_dim, C)
    assert qkv_bias.shape == (1, 3 * all_head_dim)
    assert wproj.shape == (C, all_head_dim)
    assert bproj.shape == (1, C)

    kernel = functools.partial(
        _attention_kernel, num_heads=H, head_dim=D,
        use_bias=use_bias, approx_recip=approx_recip)

    return pl.pallas_call(
        kernel,
        out_shape=jax.ShapeDtypeStruct((B, N, C), x.dtype),
        grid_spec=pltpu.PrefetchScalarGridSpec(
            num_scalar_prefetch=0,
            grid=(B,),
            in_specs=[
                pl.BlockSpec((None, N, C), lambda b: (b, 0, 0)),        # x (batch squeezed)
                # Grid-resident weights: constant index_maps -> fetched from HBM once.
                pl.BlockSpec((3 * all_head_dim, C), lambda b: (0, 0)),  # wqkv (scale folded)
                pl.BlockSpec((1, 3 * all_head_dim), lambda b: (0, 0)),  # qkv bias
                pl.BlockSpec((C, all_head_dim), lambda b: (0, 0)),      # wproj
                pl.BlockSpec((1, C), lambda b: (0, 0)),                 # proj bias
            ],
            out_specs=pl.BlockSpec((None, N, C), lambda b: (b, 0, 0)),
        ),
        compiler_params=pltpu.CompilerParams(
            dimension_semantics=("parallel",),        # batch sharded across TCs (v7x)
            vmem_limit_bytes=48 * 1024 * 1024,        # headroom on v7x's 64 MiB VMEM
        ),
    )(x, wqkv_s, qkv_bias, wproj, bproj)


def reference_attention(x, wqkv, q_bias, v_bias, wproj, bproj,
                        *, num_heads, head_dim, scale):
    """Pure-JAX reference mirroring the PyTorch forward (for sanity check)."""
    B, N, C = x.shape
    all_head_dim = num_heads * head_dim
    qkv_bias = jnp.concatenate([q_bias, jnp.zeros_like(v_bias), v_bias])
    qkv = x @ wqkv.T + qkv_bias
    qkv = qkv.reshape(B, N, 3, num_heads, head_dim).transpose(2, 0, 3, 1, 4)
    q, k, v = qkv[0] * scale, qkv[1], qkv[2]
    attn = q @ jnp.swapaxes(k, -2, -1)
    attn = jax.nn.softmax(attn, axis=-1)
    out = (attn @ v).transpose(0, 2, 1, 3).reshape(B, N, all_head_dim)
    return out @ wproj.T + bproj


if __name__ == "__main__":
    # Small shapes consistent with the module.
    B, N, C = 2, 8, 32
    num_heads = 4
    head_dim = C // num_heads
    all_head_dim = num_heads * head_dim
    scale = head_dim ** (-0.5)

    key = jax.random.PRNGKey(0)
    kx, kw1, kb1q, kb1v, kw2, kb2 = jax.random.split(key, 6)

    x = jax.random.normal(kx, (B, N, C), dtype=jnp.float32)
    wqkv = 0.05 * jax.random.normal(kw1, (3 * all_head_dim, C), dtype=jnp.float32)
    q_bias = 0.05 * jax.random.normal(kb1q, (all_head_dim,), dtype=jnp.float32)
    v_bias = 0.05 * jax.random.normal(kb1v, (all_head_dim,), dtype=jnp.float32)
    wproj = 0.05 * jax.random.normal(kw2, (C, all_head_dim), dtype=jnp.float32)
    bproj = 0.05 * jax.random.normal(kb2, (C,), dtype=jnp.float32)

    # One-time parameter restructuring / scale folding (load time, not per forward call).
    wqkv_s, qkv_bias, wproj_r, bproj_r, use_bias = prepare_params(
        wqkv, q_bias, v_bias, wproj, bproj,
        num_heads=num_heads, head_dim=head_dim, scale=scale)

    out = attention_forward(x, wqkv_s, qkv_bias, wproj_r, bproj_r,
                            num_heads=num_heads, head_dim=head_dim,
                            use_bias=use_bias, approx_recip=True)
    out = jax.block_until_ready(out)

    ref = reference_attention(x, wqkv, q_bias, v_bias, wproj, bproj,
                              num_heads=num_heads, head_dim=head_dim, scale=scale)
    assert out.shape == (B, N, C)
    # approx=True reciprocal (EUP) introduces ~1e-4-level relative error vs the exact ref.
    assert jnp.allclose(out, ref, atol=2e-3, rtol=2e-3), "mismatch vs reference"

    print("KERNEL_OK")
</pallas_src>

<mosaic_0001>
module attributes {stable_mosaic.version = 11 : i64} {
  func.func @_attention_kernel(%arg0: i32, %arg1: memref<1x8x32xf32, #tpu.memory_space<vmem>>, %arg2: memref<96x32xf32, #tpu.memory_space<vmem>>, %arg3: memref<1x96xf32, #tpu.memory_space<vmem>>, %arg4: memref<32x32xf32, #tpu.memory_space<vmem>>, %arg5: memref<1x32xf32, #tpu.memory_space<vmem>>, %arg6: memref<1x8x32xf32, #tpu.memory_space<vmem>>) attributes {dimension_semantics = [#tpu.dimension_semantics<parallel>], iteration_bounds = array<i64: 2>, scalar_prefetch = 0 : i64, scratch_operands = 0 : i64, tpu.core_type = #tpu.core_type<tc>, window_params = [{transform_indices = @transform_0, window_bounds = array<i64: 1, 8, 32>}, {pipeline_mode = #tpu.pipeline_mode<synchronous>, transform_indices = @transform_1, window_bounds = array<i64: 96, 32>}, {pipeline_mode = #tpu.pipeline_mode<synchronous>, transform_indices = @transform_2, window_bounds = array<i64: 1, 96>}, {pipeline_mode = #tpu.pipeline_mode<synchronous>, transform_indices = @transform_3, window_bounds = array<i64: 32, 32>}, {pipeline_mode = #tpu.pipeline_mode<synchronous>, transform_indices = @transform_4, window_bounds = array<i64: 1, 32>}, {transform_indices = @transform_5, window_bounds = array<i64: 1, 8, 32>}]} {
    %c0 = arith.constant 0 : index
    %c0_0 = arith.constant 0 : index
    %c0_1 = arith.constant 0 : index
    %0 = vector.load %arg1[%c0, %c0_0, %c0_1] : memref<1x8x32xf32, #tpu.memory_space<vmem>>, vector<1x8x32xf32>
    %1 = vector.shape_cast %0 : vector<1x8x32xf32> to vector<8x32xf32>
    %c0_2 = arith.constant 0 : index
    %c0_3 = arith.constant 0 : index
    %2 = vector.load %arg2[%c0_2, %c0_3] : memref<96x32xf32, #tpu.memory_space<vmem>>, vector<96x32xf32>
    %cst = arith.constant dense<0.000000e+00> : vector<8x96xf32>
    %3 = tpu.matmul %1, %2, %cst {dimension_numbers = #tpu.dot_dimension_numbers<[1], [1], [0], [0], [0, 0, 1, 0], [], []>} : vector<8x32xf32>, vector<96x32xf32>, vector<8x96xf32> -> vector<8x96xf32>
    %c0_4 = arith.constant 0 : index
    %c0_5 = arith.constant 0 : index
    %4 = vector.load %arg3[%c0_4, %c0_5] : memref<1x96xf32, #tpu.memory_space<vmem>>, vector<1x96xf32>
    %5 = vector.broadcast %4 : vector<1x96xf32> to vector<8x96xf32>
    %6 = arith.addf %3, %5 : vector<8x96xf32>
    %7 = vector.extract_strided_slice %6 {offsets = [0, 0], sizes = [8, 8], strides = [1, 1]} : vector<8x96xf32> to vector<8x8xf32>
    %8 = vector.extract_strided_slice %6 {offsets = [0, 32], sizes = [8, 8], strides = [1, 1]} : vector<8x96xf32> to vector<8x8xf32>
    %9 = vector.extract_strided_slice %6 {offsets = [0, 64], sizes = [8, 8], strides = [1, 1]} : vector<8x96xf32> to vector<8x8xf32>
    %cst_6 = arith.constant dense<0.000000e+00> : vector<8x8xf32>
    %10 = tpu.matmul %7, %8, %cst_6 {dimension_numbers = #tpu.dot_dimension_numbers<[1], [1], [0], [0], [0, 0, 1, 0], [], []>} : vector<8x8xf32>, vector<8x8xf32>, vector<8x8xf32> -> vector<8x8xf32>
    %cst_7 = arith.constant dense<0xFF800000> : vector<8xf32>
    %11 = vector.multi_reduction <maximumf>, %10, %cst_7 [1] : vector<8x8xf32> to vector<8xf32>
    %12 = vector.shape_cast %11 : vector<8xf32> to vector<8x1xf32>
    %13 = vector.broadcast %12 : vector<8x1xf32> to vector<8x8xf32>
    %14 = arith.subf %10, %13 : vector<8x8xf32>
    %15 = math.exp %14 : vector<8x8xf32>
    %cst_8 = arith.constant dense<0.000000e+00> : vector<8xf32>
    %16 = vector.multi_reduction <add>, %15, %cst_8 [1] : vector<8x8xf32> to vector<8xf32>
    %17 = vector.shape_cast %16 : vector<8xf32> to vector<8x1xf32>
    %18 = tpu.reciprocal %17 {approx = true} : vector<8x1xf32> -> vector<8x1xf32>
    %19 = vector.broadcast %18 : vector<8x1xf32> to vector<8x8xf32>
    %20 = arith.mulf %15, %19 : vector<8x8xf32>
    %cst_9 = arith.constant dense<0.000000e+00> : vector<8x8xf32>
    %21 = tpu.matmul %20, %9, %cst_9 {dimension_numbers = #tpu.dot_dimension_numbers<[1], [0], [0], [1], [0, 0, 1, 1], [], []>} : vector<8x8xf32>, vector<8x8xf32>, vector<8x8xf32> -> vector<8x8xf32>
    %22 = vector.extract_strided_slice %6 {offsets = [0, 8], sizes = [8, 8], strides = [1, 1]} : vector<8x96xf32> to vector<8x8xf32>
    %23 = vector.extract_strided_slice %6 {offsets = [0, 40], sizes = [8, 8], strides = [1, 1]} : vector<8x96xf32> to vector<8x8xf32>
    %24 = vector.extract_strided_slice %6 {offsets = [0, 72], sizes = [8, 8], strides = [1, 1]} : vector<8x96xf32> to vector<8x8xf32>
    %cst_10 = arith.constant dense<0.000000e+00> : vector<8x8xf32>
    %25 = tpu.matmul %22, %23, %cst_10 {dimension_numbers = #tpu.dot_dimension_numbers<[1], [1], [0], [0], [0, 0, 1, 0], [], []>} : vector<8x8xf32>, vector<8x8xf32>, vector<8x8xf32> -> vector<8x8xf32>
    %cst_11 = arith.constant dense<0xFF800000> : vector<8xf32>
    %26 = vector.multi_reduction <maximumf>, %25, %cst_11 [1] : vector<8x8xf32> to vector<8xf32>
    %27 = vector.shape_cast %26 : vector<8xf32> to vector<8x1xf32>
    %28 = vector.broadcast %27 : vector<8x1xf32> to vector<8x8xf32>
    %29 = arith.subf %25, %28 : vector<8x8xf32>
    %30 = math.exp %29 : vector<8x8xf32>
    %cst_12 = arith.constant dense<0.000000e+00> : vector<8xf32>
    %31 = vector.multi_reduction <add>, %30, %cst_12 [1] : vector<8x8xf32> to vector<8xf32>
    %32 = vector.shape_cast %31 : vector<8xf32> to vector<8x1xf32>
    %33 = tpu.reciprocal %32 {approx = true} : vector<8x1xf32> -> vector<8x1xf32>
    %34 = vector.broadcast %33 : vector<8x1xf32> to vector<8x8xf32>
    %35 = arith.mulf %30, %34 : vector<8x8xf32>
    %cst_13 = arith.constant dense<0.000000e+00> : vector<8x8xf32>
    %36 = tpu.matmul %35, %24, %cst_13 {dimension_numbers = #tpu.dot_dimension_numbers<[1], [0], [0], [1], [0, 0, 1, 1], [], []>} : vector<8x8xf32>, vector<8x8xf32>, vector<8x8xf32> -> vector<8x8xf32>
    %37 = vector.extract_strided_slice %6 {offsets = [0, 16], sizes = [8, 8], strides = [1, 1]} : vector<8x96xf32> to vector<8x8xf32>
    %38 = vector.extract_strided_slice %6 {offsets = [0, 48], sizes = [8, 8], strides = [1, 1]} : vector<8x96xf32> to vector<8x8xf32>
    %39 = vector.extract_strided_slice %6 {offsets = [0, 80], sizes = [8, 8], strides = [1, 1]} : vector<8x96xf32> to vector<8x8xf32>
    %cst_14 = arith.constant dense<0.000000e+00> : vector<8x8xf32>
    %40 = tpu.matmul %37, %38, %cst_14 {dimension_numbers = #tpu.dot_dimension_numbers<[1], [1], [0], [0], [0, 0, 1, 0], [], []>} : vector<8x8xf32>, vector<8x8xf32>, vector<8x8xf32> -> vector<8x8xf32>
    %cst_15 = arith.constant dense<0xFF800000> : vector<8xf32>
    %41 = vector.multi_reduction <maximumf>, %40, %cst_15 [1] : vector<8x8xf32> to vector<8xf32>
    %42 = vector.shape_cast %41 : vector<8xf32> to vector<8x1xf32>
    %43 = vector.broadcast %42 : vector<8x1xf32> to vector<8x8xf32>
    %44 = arith.subf %40, %43 : vector<8x8xf32>
    %45 = math.exp %44 : vector<8x8xf32>
    %cst_16 = arith.constant dense<0.000000e+00> : vector<8xf32>
    %46 = vector.multi_reduction <add>, %45, %cst_16 [1] : vector<8x8xf32> to vector<8xf32>
    %47 = vector.shape_cast %46 : vector<8xf32> to vector<8x1xf32>
    %48 = tpu.reciprocal %47 {approx = true} : vector<8x1xf32> -> vector<8x1xf32>
    %49 = vector.broadcast %48 : vector<8x1xf32> to vector<8x8xf32>
    %50 = arith.mulf %45, %49 : vector<8x8xf32>
    %cst_17 = arith.constant dense<0.000000e+00> : vector<8x8xf32>
    %51 = tpu.matmul %50, %39, %cst_17 {dimension_numbers = #tpu.dot_dimension_numbers<[1], [0], [0], [1], [0, 0, 1, 1], [], []>} : vector<8x8xf32>, vector<8x8xf32>, vector<8x8xf32> -> vector<8x8xf32>
    %52 = vector.extract_strided_slice %6 {offsets = [0, 24], sizes = [8, 8], strides = [1, 1]} : vector<8x96xf32> to vector<8x8xf32>
    %53 = vector.extract_strided_slice %6 {offsets = [0, 56], sizes = [8, 8], strides = [1, 1]} : vector<8x96xf32> to vector<8x8xf32>
    %54 = vector.extract_strided_slice %6 {offsets = [0, 88], sizes = [8, 8], strides = [1, 1]} : vector<8x96xf32> to vector<8x8xf32>
    %cst_18 = arith.constant dense<0.000000e+00> : vector<8x8xf32>
    %55 = tpu.matmul %52, %53, %cst_18 {dimension_numbers = #tpu.dot_dimension_numbers<[1], [1], [0], [0], [0, 0, 1, 0], [], []>} : vector<8x8xf32>, vector<8x8xf32>, vector<8x8xf32> -> vector<8x8xf32>
    %cst_19 = arith.constant dense<0xFF800000> : vector<8xf32>
    %56 = vector.multi_reduction <maximumf>, %55, %cst_19 [1] : vector<8x8xf32> to vector<8xf32>
    %57 = vector.shape_cast %56 : vector<8xf32> to vector<8x1xf32>
    %58 = vector.broadcast %57 : vector<8x1xf32> to vector<8x8xf32>
    %59 = arith.subf %55, %58 : vector<8x8xf32>
    %60 = math.exp %59 : vector<8x8xf32>
    %cst_20 = arith.constant dense<0.000000e+00> : vector<8xf32>
    %61 = vector.multi_reduction <add>, %60, %cst_20 [1] : vector<8x8xf32> to vector<8xf32>
    %62 = vector.shape_cast %61 : vector<8xf32> to vector<8x1xf32>
    %63 = tpu.reciprocal %62 {approx = true} : vector<8x1xf32> -> vector<8x1xf32>
    %64 = vector.broadcast %63 : vector<8x1xf32> to vector<8x8xf32>
    %65 = arith.mulf %60, %64 : vector<8x8xf32>
    %cst_21 = arith.constant dense<0.000000e+00> : vector<8x8xf32>
    %66 = tpu.matmul %65, %54, %cst_21 {dimension_numbers = #tpu.dot_dimension_numbers<[1], [0], [0], [1], [0, 0, 1, 1], [], []>} : vector<8x8xf32>, vector<8x8xf32>, vector<8x8xf32> -> vector<8x8xf32>
    %67 = tpu.concatenate %21, %36, %51, %66 in 1 : vector<8x8xf32>, vector<8x8xf32>, vector<8x8xf32>, vector<8x8xf32> -> vector<8x32xf32>
    %c0_22 = arith.constant 0 : index
    %c0_23 = arith.constant 0 : index
    %68 = vector.load %arg4[%c0_22, %c0_23] : memref<32x32xf32, #tpu.memory_space<vmem>>, vector<32x32xf32>
    %cst_24 = arith.constant dense<0.000000e+00> : vector<8x32xf32>
    %69 = tpu.matmul %67, %68, %cst_24 {dimension_numbers = #tpu.dot_dimension_numbers<[1], [1], [0], [0], [0, 0, 1, 0], [], []>} : vector<8x32xf32>, vector<32x32xf32>, vector<8x32xf32> -> vector<8x32xf32>
    %c0_25 = arith.constant 0 : index
    %c0_26 = arith.constant 0 : index
    %70 = vector.load %arg5[%c0_25, %c0_26] : memref<1x32xf32, #tpu.memory_space<vmem>>, vector<1x32xf32>
    %71 = vector.broadcast %70 : vector<1x32xf32> to vector<8x32xf32>
    %72 = arith.addf %69, %71 : vector<8x32xf32>
    %c0_27 = arith.constant 0 : index
    %c0_28 = arith.constant 0 : index
    %c0_29 = arith.constant 0 : index
    %73 = vector.load %arg6[%c0_27, %c0_28, %c0_29] : memref<1x8x32xf32, #tpu.memory_space<vmem>>, vector<1x8x32xf32>
    %74 = vector.shape_cast %73 : vector<1x8x32xf32> to vector<8x32xf32>
    %75 = vector.shape_cast %72 : vector<8x32xf32> to vector<1x8x32xf32>
    tpu.vector_store %arg6[%c0_27, %c0_28, %c0_29], %75 {strides = array<i32>} : memref<1x8x32xf32, #tpu.memory_space<vmem>>, vector<1x8x32xf32>,
    return
  }
  func.func @transform_0(%arg0: i32) -> (i32, i32, i32) {
    %c0_i32 = arith.constant 0 : i32
    %c0_i32_0 = arith.constant 0 : i32
    %c0_i32_1 = arith.constant 0 : i32
    return %arg0, %c0_i32, %c0_i32_0 : i32, i32, i32
  }
  func.func @transform_1(%arg0: i32) -> (i32, i32) {
    %c0_i32 = arith.constant 0 : i32
    %c0_i32_0 = arith.constant 0 : i32
    %c0_i32_1 = arith.constant 0 : i32
    return %c0_i32, %c0_i32_0 : i32, i32
  }
  func.func @transform_2(%arg0: i32) -> (i32, i32) {
    %c0_i32 = arith.constant 0 : i32
    %c0_i32_0 = arith.constant 0 : i32
    %c0_i32_1 = arith.constant 0 : i32
    return %c0_i32, %c0_i32_0 : i32, i32
  }
  func.func @transform_3(%arg0: i32) -> (i32, i32) {
    %c0_i32 = arith.constant 0 : i32
    %c0_i32_0 = arith.constant 0 : i32
    %c0_i32_1 = arith.constant 0 : i32
    return %c0_i32, %c0_i32_0 : i32, i32
  }
  func.func @transform_4(%arg0: i32) -> (i32, i32) {
    %c0_i32 = arith.constant 0 : i32
    %c0_i32_0 = arith.constant 0 : i32
    %c0_i32_1 = arith.constant 0 : i32
    return %c0_i32, %c0_i32_0 : i32, i32
  }
  func.func @transform_5(%arg0: i32) -> (i32, i32, i32) {
    %c0_i32 = arith.constant 0 : i32
    %c0_i32_0 = arith.constant 0 : i32
    %c0_i32_1 = arith.constant 0 : i32
    return %arg0, %c0_i32, %c0_i32_0 : i32, i32, i32
  }
}

</mosaic_0001>

<llo_original>
// kernel: tpu_custom_call.1
$region0: #{tpu_custom_call.1}
  #allocation0 [shape = 'u32[]', space=smem, size = 0x4, offset = 0x4, fixed_abs, tag = 'smem constant byte address 0x4 - core index']
  #allocation1 [shape = 'u32[144,128]{1,0:T(1,128)}', space=vmem, size = 0x12000, scoped, tag = 'internal scratch']
  %s0 = inlined_call_operand.vmem [shape: f32[2,8,32], index: 0, kind: input, shape index: {}]
  %s1 = inlined_call_operand.vmem [shape: f32[96,32], index: 1, kind: input, shape index: {}]
  %s2 = inlined_call_operand.vmem [shape: f32[1,96], index: 2, kind: input, shape index: {}]
  %s3 = inlined_call_operand.vmem [shape: f32[32,32], index: 3, kind: input, shape index: {}]
  %s4 = inlined_call_operand.vmem [shape: f32[1,32], index: 4, kind: input, shape index: {}]
  %s5 = inlined_call_operand.hbm [shape: f32[2,8,32], index: 5, kind: output, shape index: {}]
  %s6 = sld [smem:[#allocation0]]
  $region53: #{tpu_custom_call.1} parent=0
    _
  %s8 = ssub.s32 1, %s6
  %s9 = scalar_select 0, %s8, %s6
  $region1: #{tpu_custom_call.1} parent=0
    #allocation2 [shape = 'u8[8192]{0}', space=vmem, size = 0x2000, scoped, tag = 'output window, operand 0']
    #allocation3 [shape = 's32[2]{0}', space=sflag, size = 0x8, scoped, tag = 'scoped memory for tpu_custom_call.1']
    %10 = vsyncpa [#allocation3], 0
    %s11 = scalar_lea.sflag [#allocation3], 1
    %12 = vsyncpa %s11, 0
    loop: start=0, step=1, limit=4
    $region2: #{tpu_custom_call.1} parent=1 // loop_pre_header
      _
    $region3: #{tpu_custom_call.1} parent=1 // loop_header
      %s14 = sphi 0, %s18
      %p15 = scmp.ge.s32.totalorder %s14, 4
      %s24 = sphi 0, %s26
      %s27 = sphi 0, %s24
      %s28 = sphi 0, %s27
      %s44 = sphi 0, %s28
      %s48 = sphi 0, %s48
      %s50 = sphi 0, %s48
      %s51 = sphi 0, %s50
      %s65 = sphi 0, %s51
      %s69 = sphi 0, %s69
      %s71 = sphi 0, %s69
      %s72 = sphi 0, %s71
      %s86 = sphi 0, %s72
      %s90 = sphi 0, %s90
      %s92 = sphi 0, %s90
      %s93 = sphi 0, %s92
      %s107 = sphi 0, %s93
      %s111 = sphi 0, %s111
      %s113 = sphi 0, %s111
      %s114 = sphi 0, %s113
      %s128 = sphi 0, %s114
      %s134 = sphi 0, %s136
      %s137 = sphi 0, %s134
      %s138 = sphi 0, %s137
      %s154 = sphi 0, %s138
    $region4: #{tpu_custom_call.1} parent=1 // loop_header_branch
      %17 = sbr.rel (%p15) target = $region8
    $region5: #{tpu_custom_call.1} parent=1 // loop_body
      %s19 = ssub.s32 %s14, 1
      %s20 = ssub.s32 %s14, 2
      %s21 = sadd.s32 %s14, 1
      %s22 = ssub.s32 %s14, %s21
      %p23 = scmp.eq.s32.totalorder %s22, 0
      %s25 = sadd.s32 %s24, 1
      %s26 = scalar_select %p23, %s24, %s25
      %p29 = pneg %p23
      %p30 = scmp.eq.s32.totalorder %s14, 1
      %p31 = por %p29, %p30
      %p32 = scmp.ne.s32.totalorder %s24, %s27
      %p33 = scmp.eq.s32.totalorder %s14, 0
      %p34 = por %p32, %p33
      %p35 = scmp.ne.s32.totalorder %s24, %s27
      %p36 = scmp.eq.s32.totalorder %s19, 1
      %p37 = por %p35, %p36
      %p38 = scmp.ne.s32.totalorder %s27, %s28
      %p39 = scmp.eq.s32.totalorder %s19, 0
      %p40 = por %p38, %p39
      %p41 = scmp.ne.s32.totalorder %s27, %s28
      %p42 = scmp.eq.s32.totalorder %s20, 1
      %p43 = por %p41, %p42
      %p45 = scmp.ne.s32.totalorder %s28, %s44
      %p46 = scmp.eq.s32.totalorder %s20, 0
      %p47 = por %p45, %p46
      %s49 = sadd.s32 %s48, 1
      %p52 = scmp.eq.s32.totalorder %s14, 1
      %p53 = scmp.ne.s32.totalorder %s48, %s50
      %p54 = scmp.eq.s32.totalorder %s14, 0
      %p55 = por %p53, %p54
      %p56 = scmp.ne.s32.totalorder %s48, %s50
      %p57 = scmp.eq.s32.totalorder %s19, 1
      %p58 = por %p56, %p57
      %p59 = scmp.ne.s32.totalorder %s50, %s51
      %p60 = scmp.eq.s32.totalorder %s19, 0
      %p61 = por %p59, %p60
      %p62 = scmp.ne.s32.totalorder %s50, %s51
      %p63 = scmp.eq.s32.totalorder %s20, 1
      %p64 = por %p62, %p63
      %p66 = scmp.ne.s32.totalorder %s51, %s65
      %p67 = scmp.eq.s32.totalorder %s20, 0
      %p68 = por %p66, %p67
      %s70 = sadd.s32 %s69, 1
      %p73 = scmp.eq.s32.totalorder %s14, 1
      %p74 = scmp.ne.s32.totalorder %s69, %s71
      %p75 = scmp.eq.s32.totalorder %s14, 0
      %p76 = por %p74, %p75
      %p77 = scmp.ne.s32.totalorder %s69, %s71
      %p78 = scmp.eq.s32.totalorder %s19, 1
      %p79 = por %p77, %p78
      %p80 = scmp.ne.s32.totalorder %s71, %s72
      %p81 = scmp.eq.s32.totalorder %s19, 0
      %p82 = por %p80, %p81
      %p83 = scmp.ne.s32.totalorder %s71, %s72
      %p84 = scmp.eq.s32.totalorder %s20, 1
      %p85 = por %p83, %p84
      %p87 = scmp.ne.s32.totalorder %s72, %s86
      %p88 = scmp.eq.s32.totalorder %s20, 0
      %p89 = por %p87, %p88
      %s91 = sadd.s32 %s90, 1
      %p94 = scmp.eq.s32.totalorder %s14, 1
      %p95 = scmp.ne.s32.totalorder %s90, %s92
      %p96 = scmp.eq.s32.totalorder %s14, 0
      %p97 = por %p95, %p96
      %p98 = scmp.ne.s32.totalorder %s90, %s92
      %p99 = scmp.eq.s32.totalorder %s19, 1
      %p100 = por %p98, %p99
      %p101 = scmp.ne.s32.totalorder %s92, %s93
      %p102 = scmp.eq.s32.totalorder %s19, 0
      %p103 = por %p101, %p102
      %p104 = scmp.ne.s32.totalorder %s92, %s93
      %p105 = scmp.eq.s32.totalorder %s20, 1
      %p106 = por %p104, %p105
      %p108 = scmp.ne.s32.totalorder %s93, %s107
      %p109 = scmp.eq.s32.totalorder %s20, 0
      %p110 = por %p108, %p109
      %s112 = sadd.s32 %s111, 1
      %p115 = scmp.eq.s32.totalorder %s14, 1
      %p116 = scmp.ne.s32.totalorder %s111, %s113
      %p117 = scmp.eq.s32.totalorder %s14, 0
      %p118 = por %p116, %p117
      %p119 = scmp.ne.s32.totalorder %s111, %s113
      %p120 = scmp.eq.s32.totalorder %s19, 1
      %p121 = por %p119, %p120
      %p122 = scmp.ne.s32.totalorder %s113, %s114
      %p123 = scmp.eq.s32.totalorder %s19, 0
      %p124 = por %p122, %p123
      %p125 = scmp.ne.s32.totalorder %s113, %s114
      %p126 = scmp.eq.s32.totalorder %s20, 1
      %p127 = por %p125, %p126
      %p129 = scmp.ne.s32.totalorder %s114, %s128
      %p130 = scmp.eq.s32.totalorder %s20, 0
      %p131 = por %p129, %p130
      %s132 = ssub.s32 %s14, %s21
      %p133 = scmp.eq.s32.totalorder %s132, 0
      %s135 = sadd.s32 %s134, 1
      %s136 = scalar_select %p133, %s134, %s135
      %p139 = pneg %p133
      %p140 = scmp.eq.s32.totalorder %s14, 1
      %p141 = por %p139, %p140
      %p142 = scmp.ne.s32.totalorder %s134, %s137
      %p143 = scmp.eq.s32.totalorder %s14, 0
      %p144 = por %p142, %p143
      %p145 = scmp.ne.s32.totalorder %s134, %s137
      %p146 = scmp.eq.s32.totalorder %s19, 1
      %p147 = por %p145, %p146
      %p148 = scmp.ne.s32.totalorder %s137, %s138
      %p149 = scmp.eq.s32.totalorder %s19, 0
      %p150 = por %p148, %p149
      %p151 = scmp.ne.s32.totalorder %s137, %s138
      %p152 = scmp.eq.s32.totalorder %s20, 1
      %p153 = por %p151, %p152
      %p155 = scmp.ne.s32.totalorder %s138, %s154
      %p156 = scmp.eq.s32.totalorder %s20, 0
      %p157 = por %p155, %p156
      %p158 = scmp.le.s32.totalorder 1, %s14
      %p159 = scmp.lt.s32.totalorder %s14, 3
      %p160 = pnand %p158, %p159
      %p161 = pneg %p160
      // Predicated region
      $region9: #{tpu_custom_call.1} parent=5 // pred_check
        _
      $region10: #{tpu_custom_call.1} parent=5 // pred_check_branch
        %163 = sbr.rel (%p160) target = $region12
      $region11: #{tpu_custom_call.1} parent=5 // pred_region
        %s164 = ssub.s32 %s14, 1
        // Predicated region
        $region13: #{tpu_custom_call.1} parent=11 // pred_check
          %p165 = pneg %p61
        $region14: #{tpu_custom_call.1} parent=11 // pred_check_branch
          %167 = sbr.rel (%p165) target = $region16
        $region15: #{tpu_custom_call.1} parent=11 // pred_region
          _
        $region16: #{tpu_custom_call.1} parent=11 // pred_fallthru
          _
        // Predicated region
        $region17: #{tpu_custom_call.1} parent=11 // pred_check
          %p168 = pneg %p82
        $region18: #{tpu_custom_call.1} parent=11 // pred_check_branch
          %170 = sbr.rel (%p168) target = $region20
        $region19: #{tpu_custom_call.1} parent=11 // pred_region
          _
        $region20: #{tpu_custom_call.1} parent=11 // pred_fallthru
          _
        // Predicated region
        $region21: #{tpu_custom_call.1} parent=11 // pred_check
          %p171 = pneg %p103
        $region22: #{tpu_custom_call.1} parent=11 // pred_check_branch
          %173 = sbr.rel (%p171) target = $region24
        $region23: #{tpu_custom_call.1} parent=11 // pred_region
          _
        $region24: #{tpu_custom_call.1} parent=11 // pred_fallthru
          _
        // Predicated region
        $region25: #{tpu_custom_call.1} parent=11 // pred_check
          %p174 = pneg %p124
        $region26: #{tpu_custom_call.1} parent=11 // pred_check_branch
          %176 = sbr.rel (%p174) target = $region28
        $region27: #{tpu_custom_call.1} parent=11 // pred_region
          _
        $region28: #{tpu_custom_call.1} parent=11 // pred_fallthru
          _
      $region12: #{tpu_custom_call.1} parent=5 // pred_fallthru
        _
      %p177 = scmp.lt.s32.totalorder %s14, 2
      // Predicated region
      $region29: #{tpu_custom_call.1} parent=5 // pred_check
        %p178 = pneg %p177
      $region30: #{tpu_custom_call.1} parent=5 // pred_check_branch
        %180 = sbr.rel (%p178) target = $region32
      $region31: #{tpu_custom_call.1} parent=5 // pred_region
        // Predicated region
        $region33: #{tpu_custom_call.1} parent=31 // pred_check
          %p181 = pneg %p34
        $region34: #{tpu_custom_call.1} parent=31 // pred_check_branch
          %183 = sbr.rel (%p181) target = $region36
        $region35: #{tpu_custom_call.1} parent=31 // pred_region
          %p184 = scmp.lt.s32.totalorder %s14, 1
          %s185 = scalar_select %p184, %s14, 1
          %s186 = smul.addr %s185, 8
          %s187 = scalar_lea.vmem %s0, %s186
        $region36: #{tpu_custom_call.1} parent=31 // pred_fallthru
          _
      $region32: #{tpu_custom_call.1} parent=5 // pred_fallthru
        _
      %p188 = scmp.le.s32.totalorder 1, %s14
      %p189 = scmp.lt.s32.totalorder %s14, 3
      %p190 = pnand %p188, %p189
      %p191 = pneg %p190
      // Predicated region
      $region37: #{tpu_custom_call.1} parent=5 // pred_check
        _
      $region38: #{tpu_custom_call.1} parent=5 // pred_check_branch
        %193 = sbr.rel (%p190) target = $region40
      $region39: #{tpu_custom_call.1} parent=5 // pred_region
        %s194 = ssub.s32 %s14, 1
        %p195 = scmp.lt.s32.totalorder %s19, 1
        %s196 = scalar_select %p195, %s19, 1
        %s197 = smul.addr %s196, 8
        %s198 = scalar_lea.vmem %s0, %s197
        %p199 = pneg %p40
        %p200 = pneg %p37
        %p201 = pneg %p61
        %p202 = pneg %p58
        %p203 = pneg %p82
        %p204 = pneg %p79
        %p205 = pneg %p103
        %p206 = pneg %p100
        %p207 = pneg %p124
        %p208 = pneg %p121
        %p209 = pneg %p150
        %p210 = pneg %p147
        %s211 = sand.u32 %s137, 1
        %s212 = scalar_lea.sflag [#allocation3], %s211
        %s213 = sand.u32 %s137, 1
        %s214 = smul.addr %s213, 8
        %s215 = scalar_lea.vmem [#allocation2], %s214
        %p216 = scmp.lt.s32.totalorder %s19, 1
        %s217 = scalar_select %p216, %s19, 1
        %s218 = smul.addr %s217, 8
        %s219 = scalar_lea.vmem %s0, %s218
        %v220 = vld [vmem:[%s219] sm:$0xff]
        %v221 = vld [vmem:[%s1] sm:$0xff]
        %v222 = vld [vmem:[%s1 + $0x8] sm:$0xff]
        %v223 = vld [vmem:[%s1 + $0x10] sm:$0xff]
        %v224 = vld [vmem:[%s1 + $0x18] sm:$0xff]
        %v225 = vld [vmem:[%s1 + $0x20] sm:$0xff]
        %v226 = vld [vmem:[%s1 + $0x28] sm:$0xff]
        %v227 = vld [vmem:[%s1 + $0x30] sm:$0xff]
        %v228 = vld [vmem:[%s1 + $0x38] sm:$0xff]
        %v229 = vld [vmem:[%s1 + $0x40] sm:$0xff]
        %v230 = vld [vmem:[%s1 + $0x48] sm:$0xff]
        %v231 = vld [vmem:[%s1 + $0x50] sm:$0xff]
        %v232 = vld [vmem:[%s1 + $0x58] sm:$0xff]
        %v233 = vld [vmem:[%s2] sm:$0x1]
        %v235 = vlaneseq
        %v236 = vshrl.u32 %v235, 7
        %v237 = vsub.s32 0, %v236
        %v238 = vrot.slane %v233, %v237
        %vm240 = vcmask 261120
        %v242 = vsel %vm240, %v220, 0
        %v245 = vsel %vm240, %v221, 0
        %v248 = vsel %vm240, %v222, 0
        %v251 = vsel %vm240, %v223, 0
        %v254 = vsel %vm240, %v224, 0
        %v257 = vsel %vm240, %v225, 0
        %v260 = vsel %vm240, %v226, 0
        %v263 = vsel %vm240, %v227, 0
        %v266 = vsel %vm240, %v228, 0
        %v269 = vsel %vm240, %v229, 0
        %v272 = vsel %vm240, %v230, 0
        %v275 = vsel %vm240, %v231, 0
        %v278 = vsel %vm240, %v232, 0
        %280 = vmatprep.subr.mxu0 0.0
        %281 = vmatpush1.xpose.msra.mxu0 0.0
        %282 = vmatprep.subr.mxu0 0.0
        %283 = vmatpush1.xpose.msra.mxu0 0.0
        %284 = vmatprep.subr.mxu0 0.0
        %285 = vmatpush1.xpose.msra.mxu0 0.0
        %286 = vmatprep.subr.mxu0 0.0
        %287 = vmatpush1.xpose.msra.mxu0 0.0
        %288 = vmatprep.subr.mxu0 0.0
        %289 = vmatpush1.xpose.msra.mxu0 %v278
        %290 = vmatprep.subr.mxu0 0.0
        %291 = vmatpush1.xpose.msra.mxu0 %v275
        %292 = vmatprep.subr.mxu0 0.0
        %293 = vmatpush1.xpose.msra.mxu0 %v272
        %294 = vmatprep.subr.mxu0 0.0
        %295 = vmatpush1.xpose.msra.mxu0 %v269
        %296 = vmatprep.subr.mxu0 0.0
        %297 = vmatpush1.xpose.msra.mxu0 %v266
        %298 = vmatprep.subr.mxu0 0.0
        %299 = vmatpush1.xpose.msra.mxu0 %v263
        %300 = vmatprep.subr.mxu0 0.0
        %301 = vmatpush1.xpose.msra.mxu0 %v260
        %302 = vmatprep.subr.mxu0 0.0
        %303 = vmatpush1.xpose.msra.mxu0 %v257
        %304 = vmatprep.subr.mxu0 0.0
        %305 = vmatpush1.xpose.msra.mxu0 %v254
        %306 = vmatprep.subr.mxu0 0.0
        %307 = vmatpush1.xpose.msra.mxu0 %v251
        %308 = vmatprep.subr.mxu0 0.0
        %309 = vmatpush1.xpose.msra.mxu0 %v248
        %310 = vmatprep.subr.mxu0 0.0
        %311 = vmatpush1.xpose.msra.mxu0 %v245
        %312 = vmatprep.subr.mxu0 0.0
        %313 = vmatpush2.xpose.msra.mxu0 0.0
        %314 = vmatprep.subr.mxu0 0.0
        %315 = vmatpush2.xpose.msra.mxu0 0.0
        %316 = vmatprep.subr.mxu0 0.0
        %317 = vmatpush2.xpose.msra.mxu0 0.0
        %318 = vmatprep.subr.mxu0 0.0
        %319 = vmatpush2.xpose.msra.mxu0 0.0
        %320 = vmatprep.subr.mxu0 0.0
        %321 = vmatpush2.xpose.msra.mxu0 0.0
        %322 = vmatprep.subr.mxu0 0.0
        %323 = vmatpush2.xpose.msra.mxu0 0.0
        %324 = vmatprep.subr.mxu0 0.0
        %325 = vmatpush2.xpose.msra.mxu0 0.0
        %326 = vmatprep.subr.mxu0 0.0
        %327 = vmatpush2.xpose.msra.mxu0 0.0
        %328 = vmatprep.subr.mxu0 0.0
        %329 = vmatpush2.xpose.msra.mxu0 0.0
        %330 = vmatprep.subr.mxu0 0.0
        %331 = vmatpush2.xpose.msra.mxu0 0.0
        %332 = vmatprep.subr.mxu0 0.0
        %333 = vmatpush2.xpose.msra.mxu0 0.0
        %334 = vmatprep.subr.mxu0 0.0
        %335 = vmatpush2.xpose.msra.mxu0 0.0
        %336 = vmatprep.subr.mxu0 0.0
        %337 = vmatpush2.xpose.msra.mxu0 0.0
        %338 = vmatprep.subr.mxu0 0.0
        %339 = vmatpush2.xpose.msra.mxu0 0.0
        %340 = vmatprep.subr.mxu0 0.0
        %341 = vmatpush2.xpose.msra.mxu0 0.0
        %342 = vmatprep.subr.mxu0 0.0
        %343 = vmatpush2.xpose.msra.mxu0 0.0
        %344 = vmatprep.mubr.f32.mxu0 0.0
        %345 = vmatmul.mubr.f32.gmra.mxu0 %v242
        %v346 = vpop.f32.mrf.mxu0
        %v347 = vadd.f32 %v238, %v346
        %v348 = vpop.f32.mrf.mxu0
        %349 = vdwg.mxu0
        %351 = vrot.lane.b32.xlu0 %v347, 96
        %v352 = vpop.permute.xlu0 %351
        %vm353 = vcmask 64512
        %v354 = vsel %vm353, %v347, 0
        %v356 = vsel %vm353, %v352, 0
        %358 = vmatprep.subr.mxu0 0.0
        %359 = vmatpush1.xpose.msra.mxu0 0.0
        %360 = vmatprep.subr.mxu0 0.0
        %361 = vmatpush1.xpose.msra.mxu0 0.0
        %362 = vmatprep.subr.mxu0 0.0
        %363 = vmatpush1.xpose.msra.mxu0 0.0
        %364 = vmatprep.subr.mxu0 0.0
        %365 = vmatpush1.xpose.msra.mxu0 0.0
        %366 = vmatprep.subr.mxu0 0.0
        %367 = vmatpush1.xpose.msra.mxu0 0.0
        %368 = vmatprep.subr.mxu0 0.0
        %369 = vmatpush1.xpose.msra.mxu0 0.0
        %370 = vmatprep.subr.mxu0 0.0
        %371 = vmatpush1.xpose.msra.mxu0 0.0
        %372 = vmatprep.subr.mxu0 0.0
        %373 = vmatpush1.xpose.msra.mxu0 0.0
        %374 = vmatprep.subr.mxu0 0.0
        %375 = vmatpush1.xpose.msra.mxu0 0.0
        %376 = vmatprep.subr.mxu0 0.0
        %377 = vmatpush1.xpose.msra.mxu0 0.0
        %378 = vmatprep.subr.mxu0 0.0
        %379 = vmatpush1.xpose.msra.mxu0 0.0
        %380 = vmatprep.subr.mxu0 0.0
        %381 = vmatpush1.xpose.msra.mxu0 0.0
        %382 = vmatprep.subr.mxu0 0.0
        %383 = vmatpush1.xpose.msra.mxu0 0.0
        %384 = vmatprep.subr.mxu0 0.0
        %385 = vmatpush1.xpose.msra.mxu0 0.0
        %386 = vmatprep.subr.mxu0 0.0
        %387 = vmatpush1.xpose.msra.mxu0 0.0
        %388 = vmatprep.subr.mxu0 0.0
        %389 = vmatpush1.xpose.msra.mxu0 %v356
        %390 = vmatprep.subr.mxu0 0.0
        %391 = vmatpush2.xpose.msra.mxu0 0.0
        %392 = vmatprep.subr.mxu0 0.0
        %393 = vmatpush2.xpose.msra.mxu0 0.0
        %394 = vmatprep.subr.mxu0 0.0
        %395 = vmatpush2.xpose.msra.mxu0 0.0
        %396 = vmatprep.subr.mxu0 0.0
        %397 = vmatpush2.xpose.msra.mxu0 0.0
        %398 = vmatprep.subr.mxu0 0.0
        %399 = vmatpush2.xpose.msra.mxu0 0.0
        %400 = vmatprep.subr.mxu0 0.0
        %401 = vmatpush2.xpose.msra.mxu0 0.0
        %402 = vmatprep.subr.mxu0 0.0
        %403 = vmatpush2.xpose.msra.mxu0 0.0
        %404 = vmatprep.subr.mxu0 0.0
        %405 = vmatpush2.xpose.msra.mxu0 0.0
        %406 = vmatprep.subr.mxu0 0.0
        %407 = vmatpush2.xpose.msra.mxu0 0.0
        %408 = vmatprep.subr.mxu0 0.0
        %409 = vmatpush2.xpose.msra.mxu0 0.0
        %410 = vmatprep.subr.mxu0 0.0
        %411 = vmatpush2.xpose.msra.mxu0 0.0
        %412 = vmatprep.subr.mxu0 0.0
        %413 = vmatpush2.xpose.msra.mxu0 0.0
        %414 = vmatprep.subr.mxu0 0.0
        %415 = vmatpush2.xpose.msra.mxu0 0.0
        %416 = vmatprep.subr.mxu0 0.0
        %417 = vmatpush2.xpose.msra.mxu0 0.0
        %418 = vmatprep.subr.mxu0 0.0
        %419 = vmatpush2.xpose.msra.mxu0 0.0
        %420 = vmatprep.subr.mxu0 0.0
        %421 = vmatpush2.xpose.msra.mxu0 0.0
        %422 = vmatprep.mubr.f32.mxu0 0.0
        %423 = vmatmul.mubr.f32.gmra.mxu0 %v354
        %v424 = vpop.f32.mrf.mxu0
        %v425 = vadd.f32 0.0, %v424
        %v426 = vpop.f32.mrf.mxu0
        %427 = vdwg.mxu0
        %v428 = vsel %vm353, %v425, -inf
        %429 = vmax.xlane.f32.xlu0 %v428
        %v430 = vpop.xlane.xlu0 %429
        %v431 = vsub.f32 %v425, %v430
        %v432 = vmul.f32 %v431, 1.442695
        %v433 = vpow.pop %v432
        %v434 = vsel %vm353, %v433, 0.0
        %435 = vadd.xlane.f32.xlu0 %v434
        %v436 = vpop.xlane.xlu0 %435
        %v437 = vrcp.pop %v436
        %v438 = vmul.f32 %v433, %v437
        %439 = vrot.lane.b32.xlu0 %v347, 64
        %v440 = vpop.permute.xlu0 %439
        %v443 = vsel %vm353, %v438, 0
        %445 = vmatprep.subr.mxu0 0.0
        %446 = vmatpush1.msra.mxu0 0.0
        %447 = vmatprep.subr.mxu0 0.0
        %448 = vmatpush1.msra.mxu0 0.0
        %449 = vmatprep.subr.mxu0 0.0
        %450 = vmatpush1.msra.mxu0 0.0
        %451 = vmatprep.subr.mxu0 0.0
        %452 = vmatpush1.msra.mxu0 0.0
        %453 = vmatprep.subr.mxu0 0.0
        %454 = vmatpush1.msra.mxu0 0.0
        %455 = vmatprep.subr.mxu0 0.0
        %456 = vmatpush1.msra.mxu0 0.0
        %457 = vmatprep.subr.mxu0 0.0
        %458 = vmatpush1.msra.mxu0 0.0
        %459 = vmatprep.subr.mxu0 0.0
        %460 = vmatpush1.msra.mxu0 0.0
        %461 = vmatprep.subr.mxu0 0.0
        %462 = vmatpush1.msra.mxu0 0.0
        %463 = vmatprep.subr.mxu0 0.0
        %464 = vmatpush1.msra.mxu0 0.0
        %465 = vmatprep.subr.mxu0 0.0
        %466 = vmatpush1.msra.mxu0 0.0
        %467 = vmatprep.subr.mxu0 0.0
        %468 = vmatpush1.msra.mxu0 0.0
        %469 = vmatprep.subr.mxu0 0.0
        %470 = vmatpush1.msra.mxu0 0.0
        %471 = vmatprep.subr.mxu0 0.0
        %472 = vmatpush1.msra.mxu0 0.0
        %473 = vmatprep.subr.mxu0 0.0
        %474 = vmatpush1.msra.mxu0 0.0
        %475 = vmatprep.subr.mxu0 0.0
        %476 = vmatpush1.msra.mxu0 %v440
        %477 = vmatprep.subr.mxu0 0.0
        %478 = vmatpush2.msra.mxu0 0.0
        %479 = vmatprep.subr.mxu0 0.0
        %480 = vmatpush2.msra.mxu0 0.0
        %481 = vmatprep.subr.mxu0 0.0
        %482 = vmatpush2.msra.mxu0 0.0
        %483 = vmatprep.subr.mxu0 0.0
        %484 = vmatpush2.msra.mxu0 0.0
        %485 = vmatprep.subr.mxu0 0.0
        %486 = vmatpush2.msra.mxu0 0.0
        %487 = vmatprep.subr.mxu0 0.0
        %488 = vmatpush2.msra.mxu0 0.0
        %489 = vmatprep.subr.mxu0 0.0
        %490 = vmatpush2.msra.mxu0 0.0
        %491 = vmatprep.subr.mxu0 0.0
        %492 = vmatpush2.msra.mxu0 0.0
        %493 = vmatprep.subr.mxu0 0.0
        %494 = vmatpush2.msra.mxu0 0.0
        %495 = vmatprep.subr.mxu0 0.0
        %496 = vmatpush2.msra.mxu0 0.0
        %497 = vmatprep.subr.mxu0 0.0
        %498 = vmatpush2.msra.mxu0 0.0
        %499 = vmatprep.subr.mxu0 0.0
        %500 = vmatpush2.msra.mxu0 0.0
        %501 = vmatprep.subr.mxu0 0.0
        %502 = vmatpush2.msra.mxu0 0.0
        %503 = vmatprep.subr.mxu0 0.0
        %504 = vmatpush2.msra.mxu0 0.0
        %505 = vmatprep.subr.mxu0 0.0
        %506 = vmatpush2.msra.mxu0 0.0
        %507 = vmatprep.subr.mxu0 0.0
        %508 = vmatpush2.msra.mxu0 0.0
        %509 = vmatprep.mubr.f32.mxu0 0.0
        %510 = vmatmul.mubr.f32.gmra.mxu0 %v443
        %v511 = vpop.f32.mrf.mxu0
        %v512 = vadd.f32 0.0, %v511
        %v513 = vpop.f32.mrf.mxu0
        %514 = vdwg.mxu0
        %515 = vrot.lane.b32.xlu0 %v347, 120
        %v516 = vpop.permute.xlu0 %515
        %517 = vrot.lane.b32.xlu0 %v347, 88
        %v518 = vpop.permute.xlu0 %517
        %v519 = vsel %vm353, %v516, 0
        %v521 = vsel %vm353, %v518, 0
        %523 = vmatprep.subr.mxu0 0.0
        %524 = vmatpush1.xpose.msra.mxu0 0.0
        %525 = vmatprep.subr.mxu0 0.0
        %526 = vmatpush1.xpose.msra.mxu0 0.0
        %527 = vmatprep.subr.mxu0 0.0
        %528 = vmatpush1.xpose.msra.mxu0 0.0
        %529 = vmatprep.subr.mxu0 0.0
        %530 = vmatpush1.xpose.msra.mxu0 0.0
        %531 = vmatprep.subr.mxu0 0.0
        %532 = vmatpush1.xpose.msra.mxu0 0.0
        %533 = vmatprep.subr.mxu0 0.0
        %534 = vmatpush1.xpose.msra.mxu0 0.0
        %535 = vmatprep.subr.mxu0 0.0
        %536 = vmatpush1.xpose.msra.mxu0 0.0
        %537 = vmatprep.subr.mxu0 0.0
        %538 = vmatpush1.xpose.msra.mxu0 0.0
        %539 = vmatprep.subr.mxu0 0.0
        %540 = vmatpush1.xpose.msra.mxu0 0.0
        %541 = vmatprep.subr.mxu0 0.0
        %542 = vmatpush1.xpose.msra.mxu0 0.0
        %543 = vmatprep.subr.mxu0 0.0
        %544 = vmatpush1.xpose.msra.mxu0 0.0
        %545 = vmatprep.subr.mxu0 0.0
        %546 = vmatpush1.xpose.msra.mxu0 0.0
        %547 = vmatprep.subr.mxu0 0.0
        %548 = vmatpush1.xpose.msra.mxu0 0.0
        %549 = vmatprep.subr.mxu0 0.0
        %550 = vmatpush1.xpose.msra.mxu0 0.0
        %551 = vmatprep.subr.mxu0 0.0
        %552 = vmatpush1.xpose.msra.mxu0 0.0
        %553 = vmatprep.subr.mxu0 0.0
        %554 = vmatpush1.xpose.msra.mxu0 %v521
        %555 = vmatprep.subr.mxu0 0.0
        %556 = vmatpush2.xpose.msra.mxu0 0.0
        %557 = vmatprep.subr.mxu0 0.0
        %558 = vmatpush2.xpose.msra.mxu0 0.0
        %559 = vmatprep.subr.mxu0 0.0
        %560 = vmatpush2.xpose.msra.mxu0 0.0
        %561 = vmatprep.subr.mxu0 0.0
        %562 = vmatpush2.xpose.msra.mxu0 0.0
        %563 = vmatprep.subr.mxu0 0.0
        %564 = vmatpush2.xpose.msra.mxu0 0.0
        %565 = vmatprep.subr.mxu0 0.0
        %566 = vmatpush2.xpose.msra.mxu0 0.0
        %567 = vmatprep.subr.mxu0 0.0
        %568 = vmatpush2.xpose.msra.mxu0 0.0
        %569 = vmatprep.subr.mxu0 0.0
        %570 = vmatpush2.xpose.msra.mxu0 0.0
        %571 = vmatprep.subr.mxu0 0.0
        %572 = vmatpush2.xpose.msra.mxu0 0.0
        %573 = vmatprep.subr.mxu0 0.0
        %574 = vmatpush2.xpose.msra.mxu0 0.0
        %575 = vmatprep.subr.mxu0 0.0
        %576 = vmatpush2.xpose.msra.mxu0 0.0
        %577 = vmatprep.subr.mxu0 0.0
        %578 = vmatpush2.xpose.msra.mxu0 0.0
        %579 = vmatprep.subr.mxu0 0.0
        %580 = vmatpush2.xpose.msra.mxu0 0.0
        %581 = vmatprep.subr.mxu0 0.0
        %582 = vmatpush2.xpose.msra.mxu0 0.0
        %583 = vmatprep.subr.mxu0 0.0
        %584 = vmatpush2.xpose.msra.mxu0 0.0
        %585 = vmatprep.subr.mxu0 0.0
        %586 = vmatpush2.xpose.msra.mxu0 0.0
        %587 = vmatprep.mubr.f32.mxu0 0.0
        %588 = vmatmul.mubr.f32.gmra.mxu0 %v519
        %v589 = vpop.f32.mrf.mxu0
        %v590 = vadd.f32 0.0, %v589
        %v591 = vpop.f32.mrf.mxu0
        %592 = vdwg.mxu0
        %v593 = vsel %vm353, %v590, -inf
        %594 = vmax.xlane.f32.xlu0 %v593
        %v595 = vpop.xlane.xlu0 %594
        %v596 = vsub.f32 %v590, %v595
        %v597 = vmul.f32 %v596, 1.442695
        %v598 = vpow.pop %v597
        %v599 = vsel %vm353, %v598, 0.0
        %600 = vadd.xlane.f32.xlu0 %v599
        %v601 = vpop.xlane.xlu0 %600
        %v602 = vrcp.pop %v601
        %v603 = vmul.f32 %v598, %v602
        %604 = vrot.lane.b32.xlu0 %v347, 56
        %v605 = vpop.permute.xlu0 %604
        %v608 = vsel %vm353, %v603, 0
        %610 = vmatprep.subr.mxu0 0.0
        %611 = vmatpush1.msra.mxu0 0.0
        %612 = vmatprep.subr.mxu0 0.0
        %613 = vmatpush1.msra.mxu0 0.0
        %614 = vmatprep.subr.mxu0 0.0
        %615 = vmatpush1.msra.mxu0 0.0
        %616 = vmatprep.subr.mxu0 0.0
        %617 = vmatpush1.msra.mxu0 0.0
        %618 = vmatprep.subr.mxu0 0.0
        %619 = vmatpush1.msra.mxu0 0.0
        %620 = vmatprep.subr.mxu0 0.0
        %621 = vmatpush1.msra.mxu0 0.0
        %622 = vmatprep.subr.mxu0 0.0
        %623 = vmatpush1.msra.mxu0 0.0
        %624 = vmatprep.subr.mxu0 0.0
        %625 = vmatpush1.msra.mxu0 0.0
        %626 = vmatprep.subr.mxu0 0.0
        %627 = vmatpush1.msra.mxu0 0.0
        %628 = vmatprep.subr.mxu0 0.0
        %629 = vmatpush1.msra.mxu0 0.0
        %630 = vmatprep.subr.mxu0 0.0
        %631 = vmatpush1.msra.mxu0 0.0
        %632 = vmatprep.subr.mxu0 0.0
        %633 = vmatpush1.msra.mxu0 0.0
        %634 = vmatprep.subr.mxu0 0.0
        %635 = vmatpush1.msra.mxu0 0.0
        %636 = vmatprep.subr.mxu0 0.0
        %637 = vmatpush1.msra.mxu0 0.0
        %638 = vmatprep.subr.mxu0 0.0
        %639 = vmatpush1.msra.mxu0 0.0
        %640 = vmatprep.subr.mxu0 0.0
        %641 = vmatpush1.msra.mxu0 %v605
        %642 = vmatprep.subr.mxu0 0.0
        %643 = vmatpush2.msra.mxu0 0.0
        %644 = vmatprep.subr.mxu0 0.0
        %645 = vmatpush2.msra.mxu0 0.0
        %646 = vmatprep.subr.mxu0 0.0
        %647 = vmatpush2.msra.mxu0 0.0
        %648 = vmatprep.subr.mxu0 0.0
        %649 = vmatpush2.msra.mxu0 0.0
        %650 = vmatprep.subr.mxu0 0.0
        %651 = vmatpush2.msra.mxu0 0.0
        %652 = vmatprep.subr.mxu0 0.0
        %653 = vmatpush2.msra.mxu0 0.0
        %654 = vmatprep.subr.mxu0 0.0
        %655 = vmatpush2.msra.mxu0 0.0
        %656 = vmatprep.subr.mxu0 0.0
        %657 = vmatpush2.msra.mxu0 0.0
        %658 = vmatprep.subr.mxu0 0.0
        %659 = vmatpush2.msra.mxu0 0.0
        %660 = vmatprep.subr.mxu0 0.0
        %661 = vmatpush2.msra.mxu0 0.0
        %662 = vmatprep.subr.mxu0 0.0
        %663 = vmatpush2.msra.mxu0 0.0
        %664 = vmatprep.subr.mxu0 0.0
        %665 = vmatpush2.msra.mxu0 0.0
        %666 = vmatprep.subr.mxu0 0.0
        %667 = vmatpush2.msra.mxu0 0.0
        %668 = vmatprep.subr.mxu0 0.0
        %669 = vmatpush2.msra.mxu0 0.0
        %670 = vmatprep.subr.mxu0 0.0
        %671 = vmatpush2.msra.mxu0 0.0
        %672 = vmatprep.subr.mxu0 0.0
        %673 = vmatpush2.msra.mxu0 0.0
        %674 = vmatprep.mubr.f32.mxu0 0.0
        %675 = vmatmul.mubr.f32.gmra.mxu0 %v608
        %v676 = vpop.f32.mrf.mxu0
        %v677 = vadd.f32 0.0, %v676
        %v678 = vpop.f32.mrf.mxu0
        %679 = vdwg.mxu0
        %680 = vrot.lane.b32.xlu0 %v347, 112
        %v681 = vpop.permute.xlu0 %680
        %682 = vrot.lane.b32.xlu0 %v347, 80
        %v683 = vpop.permute.xlu0 %682
        %v684 = vsel %vm353, %v681, 0
        %v686 = vsel %vm353, %v683, 0
        %688 = vmatprep.subr.mxu0 0.0
        %689 = vmatpush1.xpose.msra.mxu0 0.0
        %690 = vmatprep.subr.mxu0 0.0
        %691 = vmatpush1.xpose.msra.mxu0 0.0
        %692 = vmatprep.subr.mxu0 0.0
        %693 = vmatpush1.xpose.msra.mxu0 0.0
        %694 = vmatprep.subr.mxu0 0.0
        %695 = vmatpush1.xpose.msra.mxu0 0.0
        %696 = vmatprep.subr.mxu0 0.0
        %697 = vmatpush1.xpose.msra.mxu0 0.0
        %698 = vmatprep.subr.mxu0 0.0
        %699 = vmatpush1.xpose.msra.mxu0 0.0
        %700 = vmatprep.subr.mxu0 0.0
        %701 = vmatpush1.xpose.msra.mxu0 0.0
        %702 = vmatprep.subr.mxu0 0.0
        %703 = vmatpush1.xpose.msra.mxu0 0.0
        %704 = vmatprep.subr.mxu0 0.0
        %705 = vmatpush1.xpose.msra.mxu0 0.0
        %706 = vmatprep.subr.mxu0 0.0
        %707 = vmatpush1.xpose.msra.mxu0 0.0
        %708 = vmatprep.subr.mxu0 0.0
        %709 = vmatpush1.xpose.msra.mxu0 0.0
        %710 = vmatprep.subr.mxu0 0.0
        %711 = vmatpush1.xpose.msra.mxu0 0.0
        %712 = vmatprep.subr.mxu0 0.0
        %713 = vmatpush1.xpose.msra.mxu0 0.0
        %714 = vmatprep.subr.mxu0 0.0
        %715 = vmatpush1.xpose.msra.mxu0 0.0
        %716 = vmatprep.subr.mxu0 0.0
        %717 = vmatpush1.xpose.msra.mxu0 0.0
        %718 = vmatprep.subr.mxu0 0.0
        %719 = vmatpush1.xpose.msra.mxu0 %v686
        %720 = vmatprep.subr.mxu0 0.0
        %721 = vmatpush2.xpose.msra.mxu0 0.0
        %722 = vmatprep.subr.mxu0 0.0
        %723 = vmatpush2.xpose.msra.mxu0 0.0
        %724 = vmatprep.subr.mxu0 0.0
        %725 = vmatpush2.xpose.msra.mxu0 0.0
        %726 = vmatprep.subr.mxu0 0.0
        %727 = vmatpush2.xpose.msra.mxu0 0.0
        %728 = vmatprep.subr.mxu0 0.0
        %729 = vmatpush2.xpose.msra.mxu0 0.0
        %730 = vmatprep.subr.mxu0 0.0
        %731 = vmatpush2.xpose.msra.mxu0 0.0
        %732 = vmatprep.subr.mxu0 0.0
        %733 = vmatpush2.xpose.msra.mxu0 0.0
        %734 = vmatprep.subr.mxu0 0.0
        %735 = vmatpush2.xpose.msra.mxu0 0.0
        %736 = vmatprep.subr.mxu0 0.0
        %737 = vmatpush2.xpose.msra.mxu0 0.0
        %738 = vmatprep.subr.mxu0 0.0
        %739 = vmatpush2.xpose.msra.mxu0 0.0
        %740 = vmatprep.subr.mxu0 0.0
        %741 = vmatpush2.xpose.msra.mxu0 0.0
        %742 = vmatprep.subr.mxu0 0.0
        %743 = vmatpush2.xpose.msra.mxu0 0.0
        %744 = vmatprep.subr.mxu0 0.0
        %745 = vmatpush2.xpose.msra.mxu0 0.0
        %746 = vmatprep.subr.mxu0 0.0
        %747 = vmatpush2.xpose.msra.mxu0 0.0
        %748 = vmatprep.subr.mxu0 0.0
        %749 = vmatpush2.xpose.msra.mxu0 0.0
        %750 = vmatprep.subr.mxu0 0.0
        %751 = vmatpush2.xpose.msra.mxu0 0.0
        %752 = vmatprep.mubr.f32.mxu0 0.0
        %753 = vmatmul.mubr.f32.gmra.mxu0 %v684
        %v754 = vpop.f32.mrf.mxu0
        %v755 = vadd.f32 0.0, %v754
        %v756 = vpop.f32.mrf.mxu0
        %757 = vdwg.mxu0
        %v758 = vsel %vm353, %v755, -inf
        %759 = vmax.xlane.f32.xlu0 %v758
        %v760 = vpop.xlane.xlu0 %759
        %v761 = vsub.f32 %v755, %v760
        %v762 = vmul.f32 %v761, 1.442695
        %v763 = vpow.pop %v762
        %v764 = vsel %vm353, %v763, 0.0
        %765 = vadd.xlane.f32.xlu0 %v764
        %v766 = vpop.xlane.xlu0 %765
        %v767 = vrcp.pop %v766
        %v768 = vmul.f32 %v763, %v767
        %769 = vrot.lane.b32.xlu0 %v347, 48
        %v770 = vpop.permute.xlu0 %769
        %v773 = vsel %vm353, %v768, 0
        %775 = vmatprep.subr.mxu0 0.0
        %776 = vmatpush1.msra.mxu0 0.0
        %777 = vmatprep.subr.mxu0 0.0
        %778 = vmatpush1.msra.mxu0 0.0
        %779 = vmatprep.subr.mxu0 0.0
        %780 = vmatpush1.msra.mxu0 0.0
        %781 = vmatprep.subr.mxu0 0.0
        %782 = vmatpush1.msra.mxu0 0.0
        %783 = vmatprep.subr.mxu0 0.0
        %784 = vmatpush1.msra.mxu0 0.0
        %785 = vmatprep.subr.mxu0 0.0
        %786 = vmatpush1.msra.mxu0 0.0
        %787 = vmatprep.subr.mxu0 0.0
        %788 = vmatpush1.msra.mxu0 0.0
        %789 = vmatprep.subr.mxu0 0.0
        %790 = vmatpush1.msra.mxu0 0.0
        %791 = vmatprep.subr.mxu0 0.0
        %792 = vmatpush1.msra.mxu0 0.0
        %793 = vmatprep.subr.mxu0 0.0
        %794 = vmatpush1.msra.mxu0 0.0
        %795 = vmatprep.subr.mxu0 0.0
        %796 = vmatpush1.msra.mxu0 0.0
        %797 = vmatprep.subr.mxu0 0.0
        %798 = vmatpush1.msra.mxu0 0.0
        %799 = vmatprep.subr.mxu0 0.0
        %800 = vmatpush1.msra.mxu0 0.0
        %801 = vmatprep.subr.mxu0 0.0
        %802 = vmatpush1.msra.mxu0 0.0
        %803 = vmatprep.subr.mxu0 0.0
        %804 = vmatpush1.msra.mxu0 0.0
        %805 = vmatprep.subr.mxu0 0.0
        %806 = vmatpush1.msra.mxu0 %v770
        %807 = vmatprep.subr.mxu0 0.0
        %808 = vmatpush2.msra.mxu0 0.0
        %809 = vmatprep.subr.mxu0 0.0
        %810 = vmatpush2.msra.mxu0 0.0
        %811 = vmatprep.subr.mxu0 0.0
        %812 = vmatpush2.msra.mxu0 0.0
        %813 = vmatprep.subr.mxu0 0.0
        %814 = vmatpush2.msra.mxu0 0.0
        %815 = vmatprep.subr.mxu0 0.0
        %816 = vmatpush2.msra.mxu0 0.0
        %817 = vmatprep.subr.mxu0 0.0
        %818 = vmatpush2.msra.mxu0 0.0
        %819 = vmatprep.subr.mxu0 0.0
        %820 = vmatpush2.msra.mxu0 0.0
        %821 = vmatprep.subr.mxu0 0.0
        %822 = vmatpush2.msra.mxu0 0.0
        %823 = vmatprep.subr.mxu0 0.0
        %824 = vmatpush2.msra.mxu0 0.0
        %825 = vmatprep.subr.mxu0 0.0
        %826 = vmatpush2.msra.mxu0 0.0
        %827 = vmatprep.subr.mxu0 0.0
        %828 = vmatpush2.msra.mxu0 0.0
        %829 = vmatprep.subr.mxu0 0.0
        %830 = vmatpush2.msra.mxu0 0.0
        %831 = vmatprep.subr.mxu0 0.0
        %832 = vmatpush2.msra.mxu0 0.0
        %833 = vmatprep.subr.mxu0 0.0
        %834 = vmatpush2.msra.mxu0 0.0
        %835 = vmatprep.subr.mxu0 0.0
        %836 = vmatpush2.msra.mxu0 0.0
        %837 = vmatprep.subr.mxu0 0.0
        %838 = vmatpush2.msra.mxu0 0.0
        %839 = vmatprep.mubr.f32.mxu0 0.0
        %840 = vmatmul.mubr.f32.gmra.mxu0 %v773
        %v841 = vpop.f32.mrf.mxu0
        %v842 = vadd.f32 0.0, %v841
        %v843 = vpop.f32.mrf.mxu0
        %844 = vdwg.mxu0
        %845 = vrot.lane.b32.xlu0 %v347, 104
        %v846 = vpop.permute.xlu0 %845
        %847 = vrot.lane.b32.xlu0 %v347, 72
        %v848 = vpop.permute.xlu0 %847
        %v849 = vsel %vm353, %v846, 0
        %v851 = vsel %vm353, %v848, 0
        %853 = vmatprep.subr.mxu0 0.0
        %854 = vmatpush1.xpose.msra.mxu0 0.0
        %855 = vmatprep.subr.mxu0 0.0
        %856 = vmatpush1.xpose.msra.mxu0 0.0
        %857 = vmatprep.subr.mxu0 0.0
        %858 = vmatpush1.xpose.msra.mxu0 0.0
        %859 = vmatprep.subr.mxu0 0.0
        %860 = vmatpush1.xpose.msra.mxu0 0.0
        %861 = vmatprep.subr.mxu0 0.0
        %862 = vmatpush1.xpose.msra.mxu0 0.0
        %863 = vmatprep.subr.mxu0 0.0
        %864 = vmatpush1.xpose.msra.mxu0 0.0
        %865 = vmatprep.subr.mxu0 0.0
        %866 = vmatpush1.xpose.msra.mxu0 0.0
        %867 = vmatprep.subr.mxu0 0.0
        %868 = vmatpush1.xpose.msra.mxu0 0.0
        %869 = vmatprep.subr.mxu0 0.0
        %870 = vmatpush1.xpose.msra.mxu0 0.0
        %871 = vmatprep.subr.mxu0 0.0
        %872 = vmatpush1.xpose.msra.mxu0 0.0
        %873 = vmatprep.subr.mxu0 0.0
        %874 = vmatpush1.xpose.msra.mxu0 0.0
        %875 = vmatprep.subr.mxu0 0.0
        %876 = vmatpush1.xpose.msra.mxu0 0.0
        %877 = vmatprep.subr.mxu0 0.0
        %878 = vmatpush1.xpose.msra.mxu0 0.0
        %879 = vmatprep.subr.mxu0 0.0
        %880 = vmatpush1.xpose.msra.mxu0 0.0
        %881 = vmatprep.subr.mxu0 0.0
        %882 = vmatpush1.xpose.msra.mxu0 0.0
        %883 = vmatprep.subr.mxu0 0.0
        %884 = vmatpush1.xpose.msra.mxu0 %v851
        %885 = vmatprep.subr.mxu0 0.0
        %886 = vmatpush2.xpose.msra.mxu0 0.0
        %887 = vmatprep.subr.mxu0 0.0
        %888 = vmatpush2.xpose.msra.mxu0 0.0
        %889 = vmatprep.subr.mxu0 0.0
        %890 = vmatpush2.xpose.msra.mxu0 0.0
        %891 = vmatprep.subr.mxu0 0.0
        %892 = vmatpush2.xpose.msra.mxu0 0.0
        %893 = vmatprep.subr.mxu0 0.0
        %894 = vmatpush2.xpose.msra.mxu0 0.0
        %895 = vmatprep.subr.mxu0 0.0
        %896 = vmatpush2.xpose.msra.mxu0 0.0
        %897 = vmatprep.subr.mxu0 0.0
        %898 = vmatpush2.xpose.msra.mxu0 0.0
        %899 = vmatprep.subr.mxu0 0.0
        %900 = vmatpush2.xpose.msra.mxu0 0.0
        %901 = vmatprep.subr.mxu0 0.0
        %902 = vmatpush2.xpose.msra.mxu0 0.0
        %903 = vmatprep.subr.mxu0 0.0
        %904 = vmatpush2.xpose.msra.mxu0 0.0
        %905 = vmatprep.subr.mxu0 0.0
        %906 = vmatpush2.xpose.msra.mxu0 0.0
        %907 = vmatprep.subr.mxu0 0.0
        %908 = vmatpush2.xpose.msra.mxu0 0.0
        %909 = vmatprep.subr.mxu0 0.0
        %910 = vmatpush2.xpose.msra.mxu0 0.0
        %911 = vmatprep.subr.mxu0 0.0
        %912 = vmatpush2.xpose.msra.mxu0 0.0
        %913 = vmatprep.subr.mxu0 0.0
        %914 = vmatpush2.xpose.msra.mxu0 0.0
        %915 = vmatprep.subr.mxu0 0.0
        %916 = vmatpush2.xpose.msra.mxu0 0.0
        %917 = vmatprep.mubr.f32.mxu0 0.0
        %918 = vmatmul.mubr.f32.gmra.mxu0 %v849
        %v919 = vpop.f32.mrf.mxu0
        %v920 = vadd.f32 0.0, %v919
        %v921 = vpop.f32.mrf.mxu0
        %922 = vdwg.mxu0
        %v923 = vsel %vm353, %v920, -inf
        %924 = vmax.xlane.f32.xlu0 %v923
        %v925 = vpop.xlane.xlu0 %924
        %v926 = vsub.f32 %v920, %v925
        %v927 = vmul.f32 %v926, 1.442695
        %v928 = vpow.pop %v927
        %v929 = vsel %vm353, %v928, 0.0
        %930 = vadd.xlane.f32.xlu0 %v929
        %v931 = vpop.xlane.xlu0 %930
        %v932 = vrcp.pop %v931
        %v933 = vmul.f32 %v928, %v932
        %934 = vrot.lane.b32.xlu0 %v347, 40
        %v935 = vpop.permute.xlu0 %934
        %v938 = vsel %vm353, %v933, 0
        %940 = vmatprep.subr.mxu0 0.0
        %941 = vmatpush1.msra.mxu0 0.0
        %942 = vmatprep.subr.mxu0 0.0
        %943 = vmatpush1.msra.mxu0 0.0
        %944 = vmatprep.subr.mxu0 0.0
        %945 = vmatpush1.msra.mxu0 0.0
        %946 = vmatprep.subr.mxu0 0.0
        %947 = vmatpush1.msra.mxu0 0.0
        %948 = vmatprep.subr.mxu0 0.0
        %949 = vmatpush1.msra.mxu0 0.0
        %950 = vmatprep.subr.mxu0 0.0
        %951 = vmatpush1.msra.mxu0 0.0
        %952 = vmatprep.subr.mxu0 0.0
        %953 = vmatpush1.msra.mxu0 0.0
        %954 = vmatprep.subr.mxu0 0.0
        %955 = vmatpush1.msra.mxu0 0.0
        %956 = vmatprep.subr.mxu0 0.0
        %957 = vmatpush1.msra.mxu0 0.0
        %958 = vmatprep.subr.mxu0 0.0
        %959 = vmatpush1.msra.mxu0 0.0
        %960 = vmatprep.subr.mxu0 0.0
        %961 = vmatpush1.msra.mxu0 0.0
        %962 = vmatprep.subr.mxu0 0.0
        %963 = vmatpush1.msra.mxu0 0.0
        %964 = vmatprep.subr.mxu0 0.0
        %965 = vmatpush1.msra.mxu0 0.0
        %966 = vmatprep.subr.mxu0 0.0
        %967 = vmatpush1.msra.mxu0 0.0
        %968 = vmatprep.subr.mxu0 0.0
        %969 = vmatpush1.msra.mxu0 0.0
        %970 = vmatprep.subr.mxu0 0.0
        %971 = vmatpush1.msra.mxu0 %v935
        %972 = vmatprep.subr.mxu0 0.0
        %973 = vmatpush2.msra.mxu0 0.0
        %974 = vmatprep.subr.mxu0 0.0
        %975 = vmatpush2.msra.mxu0 0.0
        %976 = vmatprep.subr.mxu0 0.0
        %977 = vmatpush2.msra.mxu0 0.0
        %978 = vmatprep.subr.mxu0 0.0
        %979 = vmatpush2.msra.mxu0 0.0
        %980 = vmatprep.subr.mxu0 0.0
        %981 = vmatpush2.msra.mxu0 0.0
        %982 = vmatprep.subr.mxu0 0.0
        %983 = vmatpush2.msra.mxu0 0.0
        %984 = vmatprep.subr.mxu0 0.0
        %985 = vmatpush2.msra.mxu0 0.0
        %986 = vmatprep.subr.mxu0 0.0
        %987 = vmatpush2.msra.mxu0 0.0
        %988 = vmatprep.subr.mxu0 0.0
        %989 = vmatpush2.msra.mxu0 0.0
        %990 = vmatprep.subr.mxu0 0.0
        %991 = vmatpush2.msra.mxu0 0.0
        %992 = vmatprep.subr.mxu0 0.0
        %993 = vmatpush2.msra.mxu0 0.0
        %994 = vmatprep.subr.mxu0 0.0
        %995 = vmatpush2.msra.mxu0 0.0
        %996 = vmatprep.subr.mxu0 0.0
        %997 = vmatpush2.msra.mxu0 0.0
        %998 = vmatprep.subr.mxu0 0.0
        %999 = vmatpush2.msra.mxu0 0.0
        %1000 = vmatprep.subr.mxu0 0.0
        %1001 = vmatpush2.msra.mxu0 0.0
        %1002 = vmatprep.subr.mxu0 0.0
        %1003 = vmatpush2.msra.mxu0 0.0
        %1004 = vmatprep.mubr.f32.mxu0 0.0
        %1005 = vmatmul.mubr.f32.gmra.mxu0 %v938
        %v1006 = vpop.f32.mrf.mxu0
        %v1007 = vadd.f32 0.0, %v1006
        %v1008 = vpop.f32.mrf.mxu0
        %1009 = vdwg.mxu0
        %1011 = vrot.lane.b32.xlu0 %v677, 8
        %v1012 = vpop.permute.xlu0 %1011
        %1015 = vrot.lane.b32.xlu0 %v842, 16
        %v1016 = vpop.permute.xlu0 %1015
        %1019 = vrot.lane.b32.xlu0 %v1007, 24
        %v1020 = vpop.permute.xlu0 %1019
        %v1022 = vsel %vm353, %v512, %v1012
        %vm1023 = vcmask 130048
        %v1024 = vsel %vm1023, %v1022, %v1016
        %vm1025 = vcmask 195584
        %v1026 = vsel %vm1025, %v1024, %v1020
        %v1027 = vld [vmem:[%s3] sm:$0xff]
        %v1028 = vld [vmem:[%s3 + $0x8] sm:$0xff]
        %v1029 = vld [vmem:[%s3 + $0x10] sm:$0xff]
        %v1030 = vld [vmem:[%s3 + $0x18] sm:$0xff]
        %v1031 = vld [vmem:[%s4] sm:$0x1]
        %v1033 = vlaneseq
        %v1034 = vshrl.u32 %v1033, 7
        %v1035 = vsub.s32 0, %v1034
        %v1036 = vrot.slane %v1031, %v1035
        %v1039 = vsel %vm240, %v1026, 0
        %v1042 = vsel %vm240, %v1027, 0
        %v1045 = vsel %vm240, %v1028, 0
        %v1048 = vsel %vm240, %v1029, 0
        %v1051 = vsel %vm240, %v1030, 0
        %1053 = vmatprep.subr.mxu0 0.0
        %1054 = vmatpush1.xpose.msra.mxu0 0.0
        %1055 = vmatprep.subr.mxu0 0.0
        %1056 = vmatpush1.xpose.msra.mxu0 0.0
        %1057 = vmatprep.subr.mxu0 0.0
        %1058 = vmatpush1.xpose.msra.mxu0 0.0
        %1059 = vmatprep.subr.mxu0 0.0
        %1060 = vmatpush1.xpose.msra.mxu0 0.0
        %1061 = vmatprep.subr.mxu0 0.0
        %1062 = vmatpush1.xpose.msra.mxu0 0.0
        %1063 = vmatprep.subr.mxu0 0.0
        %1064 = vmatpush1.xpose.msra.mxu0 0.0
        %1065 = vmatprep.subr.mxu0 0.0
        %1066 = vmatpush1.xpose.msra.mxu0 0.0
        %1067 = vmatprep.subr.mxu0 0.0
        %1068 = vmatpush1.xpose.msra.mxu0 0.0
        %1069 = vmatprep.subr.mxu0 0.0
        %1070 = vmatpush1.xpose.msra.mxu0 0.0
        %1071 = vmatprep.subr.mxu0 0.0
        %1072 = vmatpush1.xpose.msra.mxu0 0.0
        %1073 = vmatprep.subr.mxu0 0.0
        %1074 = vmatpush1.xpose.msra.mxu0 0.0
        %1075 = vmatprep.subr.mxu0 0.0
        %1076 = vmatpush1.xpose.msra.mxu0 0.0
        %1077 = vmatprep.subr.mxu0 0.0
        %1078 = vmatpush1.xpose.msra.mxu0 %v1051
        %1079 = vmatprep.subr.mxu0 0.0
        %1080 = vmatpush1.xpose.msra.mxu0 %v1048
        %1081 = vmatprep.subr.mxu0 0.0
        %1082 = vmatpush1.xpose.msra.mxu0 %v1045
        %1083 = vmatprep.subr.mxu0 0.0
        %1084 = vmatpush1.xpose.msra.mxu0 %v1042
        %1085 = vmatprep.subr.mxu0 0.0
        %1086 = vmatpush2.xpose.msra.mxu0 0.0
        %1087 = vmatprep.subr.mxu0 0.0
        %1088 = vmatpush2.xpose.msra.mxu0 0.0
        %1089 = vmatprep.subr.mxu0 0.0
        %1090 = vmatpush2.xpose.msra.mxu0 0.0
        %1091 = vmatprep.subr.mxu0 0.0
        %1092 = vmatpush2.xpose.msra.mxu0 0.0
        %1093 = vmatprep.subr.mxu0 0.0
        %1094 = vmatpush2.xpose.msra.mxu0 0.0
        %1095 = vmatprep.subr.mxu0 0.0
        %1096 = vmatpush2.xpose.msra.mxu0 0.0
        %1097 = vmatprep.subr.mxu0 0.0
        %1098 = vmatpush2.xpose.msra.mxu0 0.0
        %1099 = vmatprep.subr.mxu0 0.0
        %1100 = vmatpush2.xpose.msra.mxu0 0.0
        %1101 = vmatprep.subr.mxu0 0.0
        %1102 = vmatpush2.xpose.msra.mxu0 0.0
        %1103 = vmatprep.subr.mxu0 0.0
        %1104 = vmatpush2.xpose.msra.mxu0 0.0
        %1105 = vmatprep.subr.mxu0 0.0
        %1106 = vmatpush2.xpose.msra.mxu0 0.0
        %1107 = vmatprep.subr.mxu0 0.0
        %1108 = vmatpush2.xpose.msra.mxu0 0.0
        %1109 = vmatprep.subr.mxu0 0.0
        %1110 = vmatpush2.xpose.msra.mxu0 0.0
        %1111 = vmatprep.subr.mxu0 0.0
        %1112 = vmatpush2.xpose.msra.mxu0 0.0
        %1113 = vmatprep.subr.mxu0 0.0
        %1114 = vmatpush2.xpose.msra.mxu0 0.0
        %1115 = vmatprep.subr.mxu0 0.0
        %1116 = vmatpush2.xpose.msra.mxu0 0.0
        %1117 = vmatprep.mubr.f32.mxu0 0.0
        %1118 = vmatmul.mubr.f32.gmra.mxu0 %v1039
        %v1119 = vpop.f32.mrf.mxu0
        %v1120 = vadd.f32 %v1036, %v1119
        %v1121 = vpop.f32.mrf.mxu0
        %1122 = vdwg.mxu0
        %1123 = vst.msk [vmem:[%s215] sm:$0xff] %vm240, %v1120
        %s1124 = sand.u32 %s137, 1
        %s1125 = scalar_lea.sflag [#allocation3], %s1124
        %s1126 = sand.u32 %s137, 1
        %s1127 = smul.addr %s1126, 8
        %s1128 = scalar_lea.vmem [#allocation2], %s1127
        // Predicated region
        $region41: #{tpu_custom_call.1} parent=39 // pred_check
          %p1129 = pneg %p147
        $region42: #{tpu_custom_call.1} parent=39 // pred_check_branch
          %1131 = sbr.rel (%p1129) target = $region44
        $region43: #{tpu_custom_call.1} parent=39 // pred_region
          %s1133 = ssub.s32 128, 128
          %1134 = vsyncadd %s1125, %s1133
          %s1135 = smul.addr %s19, 128
          %s1136 = scalar_lea.hbm %s5, %s1135
          %s1138 = sshll.u32 %s1128, 4
          %s1139 = int_to_ptr.vmem [resolvable:$true] %s1138
          %1141 = dma.vmem_to_hbm [thread:$0]  %s1139, 128, %s1136, %s1125
        $region44: #{tpu_custom_call.1} parent=39 // pred_fallthru
          _
      $region40: #{tpu_custom_call.1} parent=5 // pred_fallthru
        _
      %p1142 = scmp.le.s32.totalorder 2, %s14
      // Predicated region
      $region45: #{tpu_custom_call.1} parent=5 // pred_check
        %p1143 = pneg %p1142
      $region46: #{tpu_custom_call.1} parent=5 // pred_check_branch
        %1145 = sbr.rel (%p1143) target = $region48
      $region47: #{tpu_custom_call.1} parent=5 // pred_region
        %s1146 = ssub.s32 %s14, 2
        // Predicated region
        $region49: #{tpu_custom_call.1} parent=47 // pred_check
          %p1147 = pneg %p153
        $region50: #{tpu_custom_call.1} parent=47 // pred_check_branch
          %1149 = sbr.rel (%p1147) target = $region52
        $region51: #{tpu_custom_call.1} parent=47 // pred_region
          %s1150 = sand.u32 %s138, 1
          %s1151 = scalar_lea.sflag [#allocation3], %s1150
          %s1152 = sand.u32 %s138, 1
          %s1153 = smul.addr %s1152, 8
          %s1154 = scalar_lea.vmem [#allocation2], %s1153
          %1155 = dma.done %s1151, 128
        $region52: #{tpu_custom_call.1} parent=47 // pred_fallthru
          _
      $region48: #{tpu_custom_call.1} parent=5 // pred_fallthru
        _
    $region6: #{tpu_custom_call.1} parent=1 // loop_footer
      %s18 = sadd.s32 1, %s14
    $region7: #{tpu_custom_call.1} parent=1 // loop_footer_branch
      %13 = sbr.rel target = $region3
    $region8: #{tpu_custom_call.1} parent=1 // loop_exit
      _
    %1156 = vsyncpa [#allocation3], 1
    %s1157 = scalar_lea.sflag [#allocation3], 1
    %1158 = vsyncpa %s1157, 1

</llo_original>
